<compile_context>
chip_gen: v5e
topology: v5e:2x2
jax: 0.10.0
libtpu: 0.0.40
codegen_flags: <defaults>
</compile_context>

<pallas_src>
import functools

import jax
import jax.numpy as jnp
from jax.experimental import pallas as pl
from jax.experimental.pallas import tpu as pltpu

GRID_SIDE = 12   # hard-coded by the module's .resize(batch, 12*12, ...)
CHANNELS = 3     # hard-coded by unfold(1, 3, 3)


def _patches_kernel(x_ref, o_ref, *, p):
    # x_ref: (G, C, 12p, 12p)    one group of G images
    # o_ref: (G, 12, C, p, 12p)  row bands:  o[g, i, c, ph, :] = x[g, c, i*p+ph, :]
    #
    # Each statement: identical shape & dim order on both sides, full-width
    # (12p-lane) last dim -> plain wide vector load/store, no relayout, no
    # masked narrow stores.  12 statements total per grid step.
    for i in range(GRID_SIDE):
        o_ref[:, i, :, :, :] = x_ref[:, :, i * p:(i + 1) * p, :]


def _round_up(x, m):
    return ((x + m - 1) // m) * m


def _vmem_block_bytes_per_image(C, H, W, p, dtype):
    """Padded VMEM footprint of one image's input+output block, double-buffered."""
    itemsize = jnp.dtype(dtype).itemsize
    sub = max(8, 32 // itemsize)      # sublane tile rows: 8 f32, 16 bf16, 32 i8
    lane = 128
    in_b = C * _round_up(H, sub) * _round_up(W, lane) * itemsize
    out_b = GRID_SIDE * C * _round_up(p, sub) * _round_up(W, lane) * itemsize
    return 2 * (in_b + out_b)         # x2: BlockSpec double-buffering


def _choose_group(B, per_image_bytes, block_budget, max_group=16):
    """Largest divisor of B (<= max_group) whose blocks fit the VMEM budget.

    Prefer leaving grid = B // G even and >= 2 so the parallel batch axis keeps
    both v7x TensorCores busy; this has no effect on single-TC v5e/v6e.
    """
    divisors = [g for g in range(1, min(B, max_group) + 1) if B % g == 0]
    fits = [g for g in divisors if g * per_image_bytes <= block_budget] or [1]
    even_grid = [g for g in fits if (B // g) >= 2 and (B // g) % 2 == 0]
    any_grid2 = [g for g in fits if (B // g) >= 2]
    return max(even_grid or any_grid2 or fits)


def patches_forward(images, patch_size):
    B, C, H, W = images.shape
    p = patch_size
    assert C == CHANNELS and H == GRID_SIDE * p and W == GRID_SIDE * p, (
        "module hard-codes 3 channels and a 12x12 patch grid")

    # --- VMEM budget derived from the actual chip (v7x: 64 MiB, v5e/v6e: 128 MiB)
    try:
        vmem_cap = int(getattr(pltpu.get_tpu_info(), "vmem_capacity_bytes",
                               64 * 1024 * 1024))
    except Exception:
        vmem_cap = 64 * 1024 * 1024
    vmem_limit = min(vmem_cap // 2, 64 * 1024 * 1024)   # scoped limit for this call
    block_budget = (vmem_limit * 3) // 4                 # headroom for compiler temps

    per_image = _vmem_block_bytes_per_image(C, H, W, p, images.dtype)
    G = _choose_group(B, per_image, block_budget)

    itemsize = jnp.dtype(images.dtype).itemsize
    cost = pl.CostEstimate(
        flops=0,
        transcendentals=0,
        bytes_accessed=2 * B * C * H * W * itemsize,   # pure read + write
    )

    out5 = pl.pallas_call(
        functools.partial(_patches_kernel, p=p),
        out_shape=jax.ShapeDtypeStruct((B, GRID_SIDE, C, p, W), images.dtype),
        grid=(B // G,),
        in_specs=[
            # whole images per step; trailing (12p, 12p) are full dims -> valid
            pl.BlockSpec((G, C, H, W), lambda g: (g, 0, 0, 0)),
        ],
        out_specs=pl.BlockSpec(
            # trailing (p, 12p) are full dims -> valid; 12p-wide lane rows
            (G, GRID_SIDE, C, p, W),
            lambda g: (g, 0, 0, 0, 0)),
        compiler_params=pltpu.CompilerParams(
            dimension_semantics=("parallel",),       # shard batch over v7x TCs
            vmem_limit_bytes=int(vmem_limit)),
        cost_estimate=cost,
    )(images)

    # Remaining permutation (j before c + packing (c,ph,pw) into one axis) as one
    # XLA transpose — fast and guaranteed, unlike an in-kernel sublane->lane
    # relayout to a lane-dense (…, 3*p*p) block.
    # TODO(synk): fuse this permutation into the downstream patch-embedding
    # matmul (reorder its contraction / weight layout) and remove it here.
    x = out5.reshape(B, GRID_SIDE, C, p, GRID_SIDE, p)   # (b, i, c, ph, j, pw)
    x = jnp.transpose(x, (0, 1, 4, 2, 3, 5))             # (b, i, j, c, ph, pw)
    return x.reshape(B, GRID_SIDE * GRID_SIDE, C * p * p)


def patches_reference(images, p):
    # pure-JAX reference for correctness checking
    B, C, H, W = images.shape
    x = images.reshape(B, C, GRID_SIDE, p, GRID_SIDE, p)
    x = x.transpose(0, 2, 4, 1, 3, 5)  # (B, 12, 12, 3, p, p)
    return x.reshape(B, GRID_SIDE * GRID_SIDE, C * p * p)


if __name__ == "__main__":
    PATCH = 8
    B = 8
    key = jax.random.PRNGKey(0)
    images = jax.random.normal(
        key, (B, CHANNELS, GRID_SIDE * PATCH, GRID_SIDE * PATCH),
        dtype=jnp.float32)

    out = patches_forward(images, PATCH)
    out = jax.block_until_ready(out)

    ref = patches_reference(images, PATCH)
    assert out.shape == (B, GRID_SIDE * GRID_SIDE, CHANNELS * PATCH * PATCH)
    assert jnp.array_equal(out, ref), "Pallas kernel output mismatch vs reference"

    print("KERNEL_OK")
</pallas_src>

<mosaic_0001>
module attributes {stable_mosaic.version = 11 : i64} {
  func.func @_patches_kernel(%arg0: i32, %arg1: memref<4x3x96x96xf32, #tpu.memory_space<vmem>>, %arg2: memref<4x12x3x8x96xf32, #tpu.memory_space<vmem>>) attributes {dimension_semantics = [#tpu.dimension_semantics<parallel>], iteration_bounds = array<i64: 2>, scalar_prefetch = 0 : i64, scratch_operands = 0 : i64, tpu.core_type = #tpu.core_type<tc>, window_params = [{transform_indices = @transform_0, window_bounds = array<i64: 4, 3, 96, 96>}, {transform_indices = @transform_1, window_bounds = array<i64: 4, 12, 3, 8, 96>}]} {
    %c0 = arith.constant 0 : index
    %c0_0 = arith.constant 0 : index
    %c0_1 = arith.constant 0 : index
    %c0_2 = arith.constant 0 : index
    %0 = vector.load %arg1[%c0, %c0_0, %c0_1, %c0_2] : memref<4x3x96x96xf32, #tpu.memory_space<vmem>>, vector<4x3x8x96xf32>
    %c0_3 = arith.constant 0 : index
    %c0_4 = arith.constant 0 : index
    %c0_5 = arith.constant 0 : index
    %c0_6 = arith.constant 0 : index
    %c0_7 = arith.constant 0 : index
    %1 = vector.load %arg2[%c0_3, %c0_4, %c0_5, %c0_6, %c0_7] : memref<4x12x3x8x96xf32, #tpu.memory_space<vmem>>, vector<4x1x3x8x96xf32>
    %2 = vector.shape_cast %1 : vector<4x1x3x8x96xf32> to vector<4x3x8x96xf32>
    %3 = vector.shape_cast %0 : vector<4x3x8x96xf32> to vector<4x1x3x8x96xf32>
    tpu.vector_store %arg2[%c0_3, %c0_4, %c0_5, %c0_6, %c0_7], %3 {strides = array<i32>} : memref<4x12x3x8x96xf32, #tpu.memory_space<vmem>>, vector<4x1x3x8x96xf32>,
    %c0_8 = arith.constant 0 : index
    %c0_9 = arith.constant 0 : index
    %c8 = arith.constant 8 : index
    %c0_10 = arith.constant 0 : index
    %4 = vector.load %arg1[%c0_8, %c0_9, %c8, %c0_10] : memref<4x3x96x96xf32, #tpu.memory_space<vmem>>, vector<4x3x8x96xf32>
    %c0_11 = arith.constant 0 : index
    %c1 = arith.constant 1 : index
    %c0_12 = arith.constant 0 : index
    %c0_13 = arith.constant 0 : index
    %c0_14 = arith.constant 0 : index
    %5 = vector.load %arg2[%c0_11, %c1, %c0_12, %c0_13, %c0_14] : memref<4x12x3x8x96xf32, #tpu.memory_space<vmem>>, vector<4x1x3x8x96xf32>
    %6 = vector.shape_cast %5 : vector<4x1x3x8x96xf32> to vector<4x3x8x96xf32>
    %7 = vector.shape_cast %4 : vector<4x3x8x96xf32> to vector<4x1x3x8x96xf32>
    tpu.vector_store %arg2[%c0_11, %c1, %c0_12, %c0_13, %c0_14], %7 {strides = array<i32>} : memref<4x12x3x8x96xf32, #tpu.memory_space<vmem>>, vector<4x1x3x8x96xf32>,
    %c0_15 = arith.constant 0 : index
    %c0_16 = arith.constant 0 : index
    %c16 = arith.constant 16 : index
    %c0_17 = arith.constant 0 : index
    %8 = vector.load %arg1[%c0_15, %c0_16, %c16, %c0_17] : memref<4x3x96x96xf32, #tpu.memory_space<vmem>>, vector<4x3x8x96xf32>
    %c0_18 = arith.constant 0 : index
    %c2 = arith.constant 2 : index
    %c0_19 = arith.constant 0 : index
    %c0_20 = arith.constant 0 : index
    %c0_21 = arith.constant 0 : index
    %9 = vector.load %arg2[%c0_18, %c2, %c0_19, %c0_20, %c0_21] : memref<4x12x3x8x96xf32, #tpu.memory_space<vmem>>, vector<4x1x3x8x96xf32>
    %10 = vector.shape_cast %9 : vector<4x1x3x8x96xf32> to vector<4x3x8x96xf32>
    %11 = vector.shape_cast %8 : vector<4x3x8x96xf32> to vector<4x1x3x8x96xf32>
    tpu.vector_store %arg2[%c0_18, %c2, %c0_19, %c0_20, %c0_21], %11 {strides = array<i32>} : memref<4x12x3x8x96xf32, #tpu.memory_space<vmem>>, vector<4x1x3x8x96xf32>,
    %c0_22 = arith.constant 0 : index
    %c0_23 = arith.constant 0 : index
    %c24 = arith.constant 24 : index
    %c0_24 = arith.constant 0 : index
    %12 = vector.load %arg1[%c0_22, %c0_23, %c24, %c0_24] : memref<4x3x96x96xf32, #tpu.memory_space<vmem>>, vector<4x3x8x96xf32>
    %c0_25 = arith.constant 0 : index
    %c3 = arith.constant 3 : index
    %c0_26 = arith.constant 0 : index
    %c0_27 = arith.constant 0 : index
    %c0_28 = arith.constant 0 : index
    %13 = vector.load %arg2[%c0_25, %c3, %c0_26, %c0_27, %c0_28] : memref<4x12x3x8x96xf32, #tpu.memory_space<vmem>>, vector<4x1x3x8x96xf32>
    %14 = vector.shape_cast %13 : vector<4x1x3x8x96xf32> to vector<4x3x8x96xf32>
    %15 = vector.shape_cast %12 : vector<4x3x8x96xf32> to vector<4x1x3x8x96xf32>
    tpu.vector_store %arg2[%c0_25, %c3, %c0_26, %c0_27, %c0_28], %15 {strides = array<i32>} : memref<4x12x3x8x96xf32, #tpu.memory_space<vmem>>, vector<4x1x3x8x96xf32>,
    %c0_29 = arith.constant 0 : index
    %c0_30 = arith.constant 0 : index
    %c32 = arith.constant 32 : index
    %c0_31 = arith.constant 0 : index
    %16 = vector.load %arg1[%c0_29, %c0_30, %c32, %c0_31] : memref<4x3x96x96xf32, #tpu.memory_space<vmem>>, vector<4x3x8x96xf32>
    %c0_32 = arith.constant 0 : index
    %c4 = arith.constant 4 : index
    %c0_33 = arith.constant 0 : index
    %c0_34 = arith.constant 0 : index
    %c0_35 = arith.constant 0 : index
    %17 = vector.load %arg2[%c0_32, %c4, %c0_33, %c0_34, %c0_35] : memref<4x12x3x8x96xf32, #tpu.memory_space<vmem>>, vector<4x1x3x8x96xf32>
    %18 = vector.shape_cast %17 : vector<4x1x3x8x96xf32> to vector<4x3x8x96xf32>
    %19 = vector.shape_cast %16 : vector<4x3x8x96xf32> to vector<4x1x3x8x96xf32>
    tpu.vector_store %arg2[%c0_32, %c4, %c0_33, %c0_34, %c0_35], %19 {strides = array<i32>} : memref<4x12x3x8x96xf32, #tpu.memory_space<vmem>>, vector<4x1x3x8x96xf32>,
    %c0_36 = arith.constant 0 : index
    %c0_37 = arith.constant 0 : index
    %c40 = arith.constant 40 : index
    %c0_38 = arith.constant 0 : index
    %20 = vector.load %arg1[%c0_36, %c0_37, %c40, %c0_38] : memref<4x3x96x96xf32, #tpu.memory_space<vmem>>, vector<4x3x8x96xf32>
    %c0_39 = arith.constant 0 : index
    %c5 = arith.constant 5 : index
    %c0_40 = arith.constant 0 : index
    %c0_41 = arith.constant 0 : index
    %c0_42 = arith.constant 0 : index
    %21 = vector.load %arg2[%c0_39, %c5, %c0_40, %c0_41, %c0_42] : memref<4x12x3x8x96xf32, #tpu.memory_space<vmem>>, vector<4x1x3x8x96xf32>
    %22 = vector.shape_cast %21 : vector<4x1x3x8x96xf32> to vector<4x3x8x96xf32>
    %23 = vector.shape_cast %20 : vector<4x3x8x96xf32> to vector<4x1x3x8x96xf32>
    tpu.vector_store %arg2[%c0_39, %c5, %c0_40, %c0_41, %c0_42], %23 {strides = array<i32>} : memref<4x12x3x8x96xf32, #tpu.memory_space<vmem>>, vector<4x1x3x8x96xf32>,
    %c0_43 = arith.constant 0 : index
    %c0_44 = arith.constant 0 : index
    %c48 = arith.constant 48 : index
    %c0_45 = arith.constant 0 : index
    %24 = vector.load %arg1[%c0_43, %c0_44, %c48, %c0_45] : memref<4x3x96x96xf32, #tpu.memory_space<vmem>>, vector<4x3x8x96xf32>
    %c0_46 = arith.constant 0 : index
    %c6 = arith.constant 6 : index
    %c0_47 = arith.constant 0 : index
    %c0_48 = arith.constant 0 : index
    %c0_49 = arith.constant 0 : index
    %25 = vector.load %arg2[%c0_46, %c6, %c0_47, %c0_48, %c0_49] : memref<4x12x3x8x96xf32, #tpu.memory_space<vmem>>, vector<4x1x3x8x96xf32>
    %26 = vector.shape_cast %25 : vector<4x1x3x8x96xf32> to vector<4x3x8x96xf32>
    %27 = vector.shape_cast %24 : vector<4x3x8x96xf32> to vector<4x1x3x8x96xf32>
    tpu.vector_store %arg2[%c0_46, %c6, %c0_47, %c0_48, %c0_49], %27 {strides = array<i32>} : memref<4x12x3x8x96xf32, #tpu.memory_space<vmem>>, vector<4x1x3x8x96xf32>,
    %c0_50 = arith.constant 0 : index
    %c0_51 = arith.constant 0 : index
    %c56 = arith.constant 56 : index
    %c0_52 = arith.constant 0 : index
    %28 = vector.load %arg1[%c0_50, %c0_51, %c56, %c0_52] : memref<4x3x96x96xf32, #tpu.memory_space<vmem>>, vector<4x3x8x96xf32>
    %c0_53 = arith.constant 0 : index
    %c7 = arith.constant 7 : index
    %c0_54 = arith.constant 0 : index
    %c0_55 = arith.constant 0 : index
    %c0_56 = arith.constant 0 : index
    %29 = vector.load %arg2[%c0_53, %c7, %c0_54, %c0_55, %c0_56] : memref<4x12x3x8x96xf32, #tpu.memory_space<vmem>>, vector<4x1x3x8x96xf32>
    %30 = vector.shape_cast %29 : vector<4x1x3x8x96xf32> to vector<4x3x8x96xf32>
    %31 = vector.shape_cast %28 : vector<4x3x8x96xf32> to vector<4x1x3x8x96xf32>
    tpu.vector_store %arg2[%c0_53, %c7, %c0_54, %c0_55, %c0_56], %31 {strides = array<i32>} : memref<4x12x3x8x96xf32, #tpu.memory_space<vmem>>, vector<4x1x3x8x96xf32>,
    %c0_57 = arith.constant 0 : index
    %c0_58 = arith.constant 0 : index
    %c64 = arith.constant 64 : index
    %c0_59 = arith.constant 0 : index
    %32 = vector.load %arg1[%c0_57, %c0_58, %c64, %c0_59] : memref<4x3x96x96xf32, #tpu.memory_space<vmem>>, vector<4x3x8x96xf32>
    %c0_60 = arith.constant 0 : index
    %c8_61 = arith.constant 8 : index
    %c0_62 = arith.constant 0 : index
    %c0_63 = arith.constant 0 : index
    %c0_64 = arith.constant 0 : index
    %33 = vector.load %arg2[%c0_60, %c8_61, %c0_62, %c0_63, %c0_64] : memref<4x12x3x8x96xf32, #tpu.memory_space<vmem>>, vector<4x1x3x8x96xf32>
    %34 = vector.shape_cast %33 : vector<4x1x3x8x96xf32> to vector<4x3x8x96xf32>
    %35 = vector.shape_cast %32 : vector<4x3x8x96xf32> to vector<4x1x3x8x96xf32>
    tpu.vector_store %arg2[%c0_60, %c8_61, %c0_62, %c0_63, %c0_64], %35 {strides = array<i32>} : memref<4x12x3x8x96xf32, #tpu.memory_space<vmem>>, vector<4x1x3x8x96xf32>,
    %c0_65 = arith.constant 0 : index
    %c0_66 = arith.constant 0 : index
    %c72 = arith.constant 72 : index
    %c0_67 = arith.constant 0 : index
    %36 = vector.load %arg1[%c0_65, %c0_66, %c72, %c0_67] : memref<4x3x96x96xf32, #tpu.memory_space<vmem>>, vector<4x3x8x96xf32>
    %c0_68 = arith.constant 0 : index
    %c9 = arith.constant 9 : index
    %c0_69 = arith.constant 0 : index
    %c0_70 = arith.constant 0 : index
    %c0_71 = arith.constant 0 : index
    %37 = vector.load %arg2[%c0_68, %c9, %c0_69, %c0_70, %c0_71] : memref<4x12x3x8x96xf32, #tpu.memory_space<vmem>>, vector<4x1x3x8x96xf32>
    %38 = vector.shape_cast %37 : vector<4x1x3x8x96xf32> to vector<4x3x8x96xf32>
    %39 = vector.shape_cast %36 : vector<4x3x8x96xf32> to vector<4x1x3x8x96xf32>
    tpu.vector_store %arg2[%c0_68, %c9, %c0_69, %c0_70, %c0_71], %39 {strides = array<i32>} : memref<4x12x3x8x96xf32, #tpu.memory_space<vmem>>, vector<4x1x3x8x96xf32>,
    %c0_72 = arith.constant 0 : index
    %c0_73 = arith.constant 0 : index
    %c80 = arith.constant 80 : index
    %c0_74 = arith.constant 0 : index
    %40 = vector.load %arg1[%c0_72, %c0_73, %c80, %c0_74] : memref<4x3x96x96xf32, #tpu.memory_space<vmem>>, vector<4x3x8x96xf32>
    %c0_75 = arith.constant 0 : index
    %c10 = arith.constant 10 : index
    %c0_76 = arith.constant 0 : index
    %c0_77 = arith.constant 0 : index
    %c0_78 = arith.constant 0 : index
    %41 = vector.load %arg2[%c0_75, %c10, %c0_76, %c0_77, %c0_78] : memref<4x12x3x8x96xf32, #tpu.memory_space<vmem>>, vector<4x1x3x8x96xf32>
    %42 = vector.shape_cast %41 : vector<4x1x3x8x96xf32> to vector<4x3x8x96xf32>
    %43 = vector.shape_cast %40 : vector<4x3x8x96xf32> to vector<4x1x3x8x96xf32>
    tpu.vector_store %arg2[%c0_75, %c10, %c0_76, %c0_77, %c0_78], %43 {strides = array<i32>} : memref<4x12x3x8x96xf32, #tpu.memory_space<vmem>>, vector<4x1x3x8x96xf32>,
    %c0_79 = arith.constant 0 : index
    %c0_80 = arith.constant 0 : index
    %c88 = arith.constant 88 : index
    %c0_81 = arith.constant 0 : index
    %44 = vector.load %arg1[%c0_79, %c0_80, %c88, %c0_81] : memref<4x3x96x96xf32, #tpu.memory_space<vmem>>, vector<4x3x8x96xf32>
    %c0_82 = arith.constant 0 : index
    %c11 = arith.constant 11 : index
    %c0_83 = arith.constant 0 : index
    %c0_84 = arith.constant 0 : index
    %c0_85 = arith.constant 0 : index
    %45 = vector.load %arg2[%c0_82, %c11, %c0_83, %c0_84, %c0_85] : memref<4x12x3x8x96xf32, #tpu.memory_space<vmem>>, vector<4x1x3x8x96xf32>
    %46 = vector.shape_cast %45 : vector<4x1x3x8x96xf32> to vector<4x3x8x96xf32>
    %47 = vector.shape_cast %44 : vector<4x3x8x96xf32> to vector<4x1x3x8x96xf32>
    tpu.vector_store %arg2[%c0_82, %c11, %c0_83, %c0_84, %c0_85], %47 {strides = array<i32>} : memref<4x12x3x8x96xf32, #tpu.memory_space<vmem>>, vector<4x1x3x8x96xf32>,
    return
  }
  func.func @transform_0(%arg0: i32) -> (i32, i32, i32, i32) {
    %c0_i32 = arith.constant 0 : i32
    %c0_i32_0 = arith.constant 0 : i32
    %c0_i32_1 = arith.constant 0 : i32
    %c0_i32_2 = arith.constant 0 : i32
    return %arg0, %c0_i32, %c0_i32_0, %c0_i32_1 : i32, i32, i32, i32
  }
  func.func @transform_1(%arg0: i32) -> (i32, i32, i32, i32, i32) {
    %c0_i32 = arith.constant 0 : i32
    %c0_i32_0 = arith.constant 0 : i32
    %c0_i32_1 = arith.constant 0 : i32
    %c0_i32_2 = arith.constant 0 : i32
    %c0_i32_3 = arith.constant 0 : i32
    return %arg0, %c0_i32, %c0_i32_0, %c0_i32_1, %c0_i32_2 : i32, i32, i32, i32, i32
  }
}

</mosaic_0001>

<llo_original>
// kernel: tpu_custom_call.1
$region0: #{tpu_custom_call.1}
  #allocation0 [shape = 'u32[]', space=smem, size = 0x4, offset = 0x4, fixed_abs, tag = 'smem constant byte address 0x4 - core index']
  #allocation1 [shape = 'u32[72,128]{1,0:T(1,128)}', space=vmem, size = 0x9000, scoped, tag = 'internal scratch']
  %s0 = inlined_call_operand.hbm [shape: f32[8,3,96,96], index: 0, kind: input, shape index: {}]
  %s1 = inlined_call_operand.hbm [shape: f32[8,12,3,8,96], index: 1, kind: output, shape index: {}]
  %s2 = sld [smem:[#allocation0]]
  $region41: #{tpu_custom_call.1} parent=0
    _
  %s4 = ssub.s32 1, %s2
  %s5 = scalar_select 0, %s4, %s2
  $region1: #{tpu_custom_call.1} parent=0
    #allocation2 [shape = 'u8[1179648]{0}', space=vmem, size = 0x120000, scoped, tag = 'input window, operand 0']
    #allocation3 [shape = 's32[2]{0}', space=sflag, size = 0x8, scoped, tag = 'scoped memory for tpu_custom_call.1']
    #allocation4 [shape = 's32[2]{0}', space=sflag, size = 0x8, scoped, tag = 'scoped memory for tpu_custom_call.1']
    #allocation5 [shape = 'u8[1179648]{0}', space=vmem, size = 0x120000, scoped, tag = 'output window, operand 0']
    %6 = vsyncpa [#allocation3], 0
    %s7 = scalar_lea.sflag [#allocation3], 1
    %8 = vsyncpa %s7, 0
    %9 = vsyncpa [#allocation4], 0
    %s10 = scalar_lea.sflag [#allocation4], 1
    %11 = vsyncpa %s10, 0
    loop: start=0, step=1, limit=4
    $region2: #{tpu_custom_call.1} parent=1 // loop_pre_header
      _
    $region3: #{tpu_custom_call.1} parent=1 // loop_header
      %s13 = sphi 0, %s17
      %p14 = scmp.ge.s32.totalorder %s13, 4
      %s23 = sphi 0, %s25
      %s26 = sphi 0, %s23
      %s27 = sphi 0, %s26
      %s43 = sphi 0, %s27
      %s49 = sphi 0, %s51
      %s52 = sphi 0, %s49
      %s53 = sphi 0, %s52
      %s69 = sphi 0, %s53
    $region4: #{tpu_custom_call.1} parent=1 // loop_header_branch
      %16 = sbr.rel (%p14) target = $region8
    $region5: #{tpu_custom_call.1} parent=1 // loop_body
      %s18 = ssub.s32 %s13, 1
      %s19 = ssub.s32 %s13, 2
      %s20 = sadd.s32 %s13, 1
      %s21 = ssub.s32 %s13, %s20
      %p22 = scmp.eq.s32.totalorder %s21, 0
      %s24 = sadd.s32 %s23, 1
      %s25 = scalar_select %p22, %s23, %s24
      %p28 = pneg %p22
      %p29 = scmp.eq.s32.totalorder %s13, 1
      %p30 = por %p28, %p29
      %p31 = scmp.ne.s32.totalorder %s23, %s26
      %p32 = scmp.eq.s32.totalorder %s13, 0
      %p33 = por %p31, %p32
      %p34 = scmp.ne.s32.totalorder %s23, %s26
      %p35 = scmp.eq.s32.totalorder %s18, 1
      %p36 = por %p34, %p35
      %p37 = scmp.ne.s32.totalorder %s26, %s27
      %p38 = scmp.eq.s32.totalorder %s18, 0
      %p39 = por %p37, %p38
      %p40 = scmp.ne.s32.totalorder %s26, %s27
      %p41 = scmp.eq.s32.totalorder %s19, 1
      %p42 = por %p40, %p41
      %p44 = scmp.ne.s32.totalorder %s27, %s43
      %p45 = scmp.eq.s32.totalorder %s19, 0
      %p46 = por %p44, %p45
      %s47 = ssub.s32 %s13, %s20
      %p48 = scmp.eq.s32.totalorder %s47, 0
      %s50 = sadd.s32 %s49, 1
      %s51 = scalar_select %p48, %s49, %s50
      %p54 = pneg %p48
      %p55 = scmp.eq.s32.totalorder %s13, 1
      %p56 = por %p54, %p55
      %p57 = scmp.ne.s32.totalorder %s49, %s52
      %p58 = scmp.eq.s32.totalorder %s13, 0
      %p59 = por %p57, %p58
      %p60 = scmp.ne.s32.totalorder %s49, %s52
      %p61 = scmp.eq.s32.totalorder %s18, 1
      %p62 = por %p60, %p61
      %p63 = scmp.ne.s32.totalorder %s52, %s53
      %p64 = scmp.eq.s32.totalorder %s18, 0
      %p65 = por %p63, %p64
      %p66 = scmp.ne.s32.totalorder %s52, %s53
      %p67 = scmp.eq.s32.totalorder %s19, 1
      %p68 = por %p66, %p67
      %p70 = scmp.ne.s32.totalorder %s53, %s69
      %p71 = scmp.eq.s32.totalorder %s19, 0
      %p72 = por %p70, %p71
      %p73 = scmp.le.s32.totalorder 1, %s13
      %p74 = scmp.lt.s32.totalorder %s13, 3
      %p75 = pnand %p73, %p74
      %p76 = pneg %p75
      // Predicated region
      $region9: #{tpu_custom_call.1} parent=5 // pred_check
        _
      $region10: #{tpu_custom_call.1} parent=5 // pred_check_branch
        %78 = sbr.rel (%p75) target = $region12
      $region11: #{tpu_custom_call.1} parent=5 // pred_region
        %s79 = ssub.s32 %s13, 1
      $region12: #{tpu_custom_call.1} parent=5 // pred_fallthru
        _
      %p80 = scmp.lt.s32.totalorder %s13, 2
      // Predicated region
      $region13: #{tpu_custom_call.1} parent=5 // pred_check
        %p81 = pneg %p80
      $region14: #{tpu_custom_call.1} parent=5 // pred_check_branch
        %83 = sbr.rel (%p81) target = $region16
      $region15: #{tpu_custom_call.1} parent=5 // pred_region
        // Predicated region
        $region17: #{tpu_custom_call.1} parent=15 // pred_check
          %p84 = pneg %p33
        $region18: #{tpu_custom_call.1} parent=15 // pred_check_branch
          %86 = sbr.rel (%p84) target = $region20
        $region19: #{tpu_custom_call.1} parent=15 // pred_region
          %s87 = sand.u32 %s23, 1
          %s88 = scalar_lea.sflag [#allocation3], %s87
          %s89 = sand.u32 %s23, 1
          %s90 = smul.addr %s89, 1152
          %s91 = scalar_lea.vmem [#allocation2], %s90
          %s92 = smul.u32 4, %s13
          %94 = vsyncadd %s88, 0
          %s95 = smul.addr %s92, 36
          %s96 = smul.addr %s95, 8
          %s97 = scalar_lea.hbm %s0, %s96
          %s98 = sshll.u32 %s97, 4
          %s99 = int_to_ptr.hbm [resolvable:$true] %s98
          %s100 = sshll.u32 %s91, 4
          %s101 = int_to_ptr.vmem [resolvable:$true] %s100
          %106 = dma.hbm_to_vmem [thread:$0]  %s99, 18432, %s101, %s88, 128, 128, 8
        $region20: #{tpu_custom_call.1} parent=15 // pred_fallthru
          _
      $region16: #{tpu_custom_call.1} parent=5 // pred_fallthru
        _
      %p107 = scmp.le.s32.totalorder 1, %s13
      %p108 = scmp.lt.s32.totalorder %s13, 3
      %p109 = pnand %p107, %p108
      %p110 = pneg %p109
      // Predicated region
      $region21: #{tpu_custom_call.1} parent=5 // pred_check
        _
      $region22: #{tpu_custom_call.1} parent=5 // pred_check_branch
        %112 = sbr.rel (%p109) target = $region24
      $region23: #{tpu_custom_call.1} parent=5 // pred_region
        %s113 = ssub.s32 %s13, 1
        %s114 = sand.u32 %s26, 1
        %s115 = scalar_lea.sflag [#allocation3], %s114
        %s116 = sand.u32 %s26, 1
        %s117 = smul.addr %s116, 1152
        %s118 = scalar_lea.vmem [#allocation2], %s117
        // Predicated region
        $region25: #{tpu_custom_call.1} parent=23 // pred_check
          %p119 = pneg %p39
        $region26: #{tpu_custom_call.1} parent=23 // pred_check_branch
          %121 = sbr.rel (%p119) target = $region28
        $region27: #{tpu_custom_call.1} parent=23 // pred_region
          %123 = dma.done %s115, 18432
        $region28: #{tpu_custom_call.1} parent=23 // pred_fallthru
          _
        %s124 = sand.u32 %s26, 1
        %s125 = scalar_lea.sflag [#allocation3], %s124
        %s126 = sand.u32 %s26, 1
        %s127 = smul.addr %s126, 1152
        %s128 = scalar_lea.vmem [#allocation2], %s127
        %p129 = pneg %p39
        %p130 = pneg %p36
        %p131 = pneg %p65
        %p132 = pneg %p62
        %s133 = sand.u32 %s52, 1
        %s134 = scalar_lea.sflag [#allocation4], %s133
        %s135 = sand.u32 %s52, 1
        %s136 = smul.addr %s135, 1152
        %s137 = scalar_lea.vmem [#allocation5], %s136
        %s138 = smul.u32 4, %s18
        %s139 = smul.u32 4, %s18
        %v140 = vld [vmem:[%s118] sm:$0xff]
        %v141 = vld [vmem:[%s118 + $0x60] sm:$0xff]
        %v142 = vld [vmem:[%s118 + $0xc0] sm:$0xff]
        %v143 = vld [vmem:[%s118 + $0x120] sm:$0xff]
        %v144 = vld [vmem:[%s118 + $0x180] sm:$0xff]
        %v145 = vld [vmem:[%s118 + $0x1e0] sm:$0xff]
        %v146 = vld [vmem:[%s118 + $0x240] sm:$0xff]
        %v147 = vld [vmem:[%s118 + $0x2a0] sm:$0xff]
        %v148 = vld [vmem:[%s118 + $0x300] sm:$0xff]
        %v149 = vld [vmem:[%s118 + $0x360] sm:$0xff]
        %v150 = vld [vmem:[%s118 + $0x3c0] sm:$0xff]
        %v151 = vld [vmem:[%s118 + $0x420] sm:$0xff]
        %vm152 = vcmask 785408
        %153 = vst.msk [vmem:[%s137] sm:$0xff] %vm152, %v140
        %154 = vst.msk [vmem:[%s137 + $0x8] sm:$0xff] %vm152, %v141
        %155 = vst.msk [vmem:[%s137 + $0x10] sm:$0xff] %vm152, %v142
        %156 = vst.msk [vmem:[%s137 + $0x120] sm:$0xff] %vm152, %v143
        %157 = vst.msk [vmem:[%s137 + $0x128] sm:$0xff] %vm152, %v144
        %158 = vst.msk [vmem:[%s137 + $0x130] sm:$0xff] %vm152, %v145
        %159 = vst.msk [vmem:[%s137 + $0x240] sm:$0xff] %vm152, %v146
        %160 = vst.msk [vmem:[%s137 + $0x248] sm:$0xff] %vm152, %v147
        %161 = vst.msk [vmem:[%s137 + $0x250] sm:$0xff] %vm152, %v148
        %162 = vst.msk [vmem:[%s137 + $0x360] sm:$0xff] %vm152, %v149
        %163 = vst.msk [vmem:[%s137 + $0x368] sm:$0xff] %vm152, %v150
        %164 = vst.msk [vmem:[%s137 + $0x370] sm:$0xff] %vm152, %v151
        %v165 = vld [vmem:[%s118 + $0x8] sm:$0xff]
        %v166 = vld [vmem:[%s118 + $0x68] sm:$0xff]
        %v167 = vld [vmem:[%s118 + $0xc8] sm:$0xff]
        %v168 = vld [vmem:[%s118 + $0x128] sm:$0xff]
        %v169 = vld [vmem:[%s118 + $0x188] sm:$0xff]
        %v170 = vld [vmem:[%s118 + $0x1e8] sm:$0xff]
        %v171 = vld [vmem:[%s118 + $0x248] sm:$0xff]
        %v172 = vld [vmem:[%s118 + $0x2a8] sm:$0xff]
        %v173 = vld [vmem:[%s118 + $0x308] sm:$0xff]
        %v174 = vld [vmem:[%s118 + $0x368] sm:$0xff]
        %v175 = vld [vmem:[%s118 + $0x3c8] sm:$0xff]
        %v176 = vld [vmem:[%s118 + $0x428] sm:$0xff]
        %s177 = scalar_lea.vmem %s137, 24 [#allocation5]
        %178 = vst.msk [vmem:[%s177] sm:$0xff] %vm152, %v165
        %179 = vst.msk [vmem:[%s177 + $0x8] sm:$0xff] %vm152, %v166
        %180 = vst.msk [vmem:[%s177 + $0x10] sm:$0xff] %vm152, %v167
        %181 = vst.msk [vmem:[%s177 + $0x120] sm:$0xff] %vm152, %v168
        %182 = vst.msk [vmem:[%s177 + $0x128] sm:$0xff] %vm152, %v169
        %183 = vst.msk [vmem:[%s177 + $0x130] sm:$0xff] %vm152, %v170
        %184 = vst.msk [vmem:[%s177 + $0x240] sm:$0xff] %vm152, %v171
        %185 = vst.msk [vmem:[%s177 + $0x248] sm:$0xff] %vm152, %v172
        %186 = vst.msk [vmem:[%s177 + $0x250] sm:$0xff] %vm152, %v173
        %187 = vst.msk [vmem:[%s177 + $0x360] sm:$0xff] %vm152, %v174
        %188 = vst.msk [vmem:[%s177 + $0x368] sm:$0xff] %vm152, %v175
        %189 = vst.msk [vmem:[%s177 + $0x370] sm:$0xff] %vm152, %v176
        %v190 = vld [vmem:[%s118 + $0x10] sm:$0xff]
        %v191 = vld [vmem:[%s118 + $0x70] sm:$0xff]
        %v192 = vld [vmem:[%s118 + $0xd0] sm:$0xff]
        %v193 = vld [vmem:[%s118 + $0x130] sm:$0xff]
        %v194 = vld [vmem:[%s118 + $0x190] sm:$0xff]
        %v195 = vld [vmem:[%s118 + $0x1f0] sm:$0xff]
        %v196 = vld [vmem:[%s118 + $0x250] sm:$0xff]
        %v197 = vld [vmem:[%s118 + $0x2b0] sm:$0xff]
        %v198 = vld [vmem:[%s118 + $0x310] sm:$0xff]
        %v199 = vld [vmem:[%s118 + $0x370] sm:$0xff]
        %v200 = vld [vmem:[%s118 + $0x3d0] sm:$0xff]
        %v201 = vld [vmem:[%s118 + $0x430] sm:$0xff]
        %s202 = scalar_lea.vmem %s137, 48 [#allocation5]
        %203 = vst.msk [vmem:[%s202] sm:$0xff] %vm152, %v190
        %204 = vst.msk [vmem:[%s202 + $0x8] sm:$0xff] %vm152, %v191
        %205 = vst.msk [vmem:[%s202 + $0x10] sm:$0xff] %vm152, %v192
        %206 = vst.msk [vmem:[%s202 + $0x120] sm:$0xff] %vm152, %v193
        %207 = vst.msk [vmem:[%s202 + $0x128] sm:$0xff] %vm152, %v194
        %208 = vst.msk [vmem:[%s202 + $0x130] sm:$0xff] %vm152, %v195
        %209 = vst.msk [vmem:[%s202 + $0x240] sm:$0xff] %vm152, %v196
        %210 = vst.msk [vmem:[%s202 + $0x248] sm:$0xff] %vm152, %v197
        %211 = vst.msk [vmem:[%s202 + $0x250] sm:$0xff] %vm152, %v198
        %212 = vst.msk [vmem:[%s202 + $0x360] sm:$0xff] %vm152, %v199
        %213 = vst.msk [vmem:[%s202 + $0x368] sm:$0xff] %vm152, %v200
        %214 = vst.msk [vmem:[%s202 + $0x370] sm:$0xff] %vm152, %v201
        %v215 = vld [vmem:[%s118 + $0x18] sm:$0xff]
        %v216 = vld [vmem:[%s118 + $0x78] sm:$0xff]
        %v217 = vld [vmem:[%s118 + $0xd8] sm:$0xff]
        %v218 = vld [vmem:[%s118 + $0x138] sm:$0xff]
        %v219 = vld [vmem:[%s118 + $0x198] sm:$0xff]
        %v220 = vld [vmem:[%s118 + $0x1f8] sm:$0xff]
        %v221 = vld [vmem:[%s118 + $0x258] sm:$0xff]
        %v222 = vld [vmem:[%s118 + $0x2b8] sm:$0xff]
        %v223 = vld [vmem:[%s118 + $0x318] sm:$0xff]
        %v224 = vld [vmem:[%s118 + $0x378] sm:$0xff]
        %v225 = vld [vmem:[%s118 + $0x3d8] sm:$0xff]
        %v226 = vld [vmem:[%s118 + $0x438] sm:$0xff]
        %s227 = scalar_lea.vmem %s137, 72 [#allocation5]
        %228 = vst.msk [vmem:[%s227] sm:$0xff] %vm152, %v215
        %229 = vst.msk [vmem:[%s227 + $0x8] sm:$0xff] %vm152, %v216
        %230 = vst.msk [vmem:[%s227 + $0x10] sm:$0xff] %vm152, %v217
        %231 = vst.msk [vmem:[%s227 + $0x120] sm:$0xff] %vm152, %v218
        %232 = vst.msk [vmem:[%s227 + $0x128] sm:$0xff] %vm152, %v219
        %233 = vst.msk [vmem:[%s227 + $0x130] sm:$0xff] %vm152, %v220
        %234 = vst.msk [vmem:[%s227 + $0x240] sm:$0xff] %vm152, %v221
        %235 = vst.msk [vmem:[%s227 + $0x248] sm:$0xff] %vm152, %v222
        %236 = vst.msk [vmem:[%s227 + $0x250] sm:$0xff] %vm152, %v223
        %237 = vst.msk [vmem:[%s227 + $0x360] sm:$0xff] %vm152, %v224
        %238 = vst.msk [vmem:[%s227 + $0x368] sm:$0xff] %vm152, %v225
        %239 = vst.msk [vmem:[%s227 + $0x370] sm:$0xff] %vm152, %v226
        %v240 = vld [vmem:[%s118 + $0x20] sm:$0xff]
        %v241 = vld [vmem:[%s118 + $0x80] sm:$0xff]
        %v242 = vld [vmem:[%s118 + $0xe0] sm:$0xff]
        %v243 = vld [vmem:[%s118 + $0x140] sm:$0xff]
        %v244 = vld [vmem:[%s118 + $0x1a0] sm:$0xff]
        %v245 = vld [vmem:[%s118 + $0x200] sm:$0xff]
        %v246 = vld [vmem:[%s118 + $0x260] sm:$0xff]
        %v247 = vld [vmem:[%s118 + $0x2c0] sm:$0xff]
        %v248 = vld [vmem:[%s118 + $0x320] sm:$0xff]
        %v249 = vld [vmem:[%s118 + $0x380] sm:$0xff]
        %v250 = vld [vmem:[%s118 + $0x3e0] sm:$0xff]
        %v251 = vld [vmem:[%s118 + $0x440] sm:$0xff]
        %s252 = scalar_lea.vmem %s137, 96 [#allocation5]
        %253 = vst.msk [vmem:[%s252] sm:$0xff] %vm152, %v240
        %254 = vst.msk [vmem:[%s252 + $0x8] sm:$0xff] %vm152, %v241
        %255 = vst.msk [vmem:[%s252 + $0x10] sm:$0xff] %vm152, %v242
        %256 = vst.msk [vmem:[%s252 + $0x120] sm:$0xff] %vm152, %v243
        %257 = vst.msk [vmem:[%s252 + $0x128] sm:$0xff] %vm152, %v244
        %258 = vst.msk [vmem:[%s252 + $0x130] sm:$0xff] %vm152, %v245
        %259 = vst.msk [vmem:[%s252 + $0x240] sm:$0xff] %vm152, %v246
        %260 = vst.msk [vmem:[%s252 + $0x248] sm:$0xff] %vm152, %v247
        %261 = vst.msk [vmem:[%s252 + $0x250] sm:$0xff] %vm152, %v248
        %262 = vst.msk [vmem:[%s252 + $0x360] sm:$0xff] %vm152, %v249
        %263 = vst.msk [vmem:[%s252 + $0x368] sm:$0xff] %vm152, %v250
        %264 = vst.msk [vmem:[%s252 + $0x370] sm:$0xff] %vm152, %v251
        %v265 = vld [vmem:[%s118 + $0x28] sm:$0xff]
        %v266 = vld [vmem:[%s118 + $0x88] sm:$0xff]
        %v267 = vld [vmem:[%s118 + $0xe8] sm:$0xff]
        %v268 = vld [vmem:[%s118 + $0x148] sm:$0xff]
        %v269 = vld [vmem:[%s118 + $0x1a8] sm:$0xff]
        %v270 = vld [vmem:[%s118 + $0x208] sm:$0xff]
        %v271 = vld [vmem:[%s118 + $0x268] sm:$0xff]
        %v272 = vld [vmem:[%s118 + $0x2c8] sm:$0xff]
        %v273 = vld [vmem:[%s118 + $0x328] sm:$0xff]
        %v274 = vld [vmem:[%s118 + $0x388] sm:$0xff]
        %v275 = vld [vmem:[%s118 + $0x3e8] sm:$0xff]
        %v276 = vld [vmem:[%s118 + $0x448] sm:$0xff]
        %s277 = scalar_lea.vmem %s137, 120 [#allocation5]
        %278 = vst.msk [vmem:[%s277] sm:$0xff] %vm152, %v265
        %279 = vst.msk [vmem:[%s277 + $0x8] sm:$0xff] %vm152, %v266
        %280 = vst.msk [vmem:[%s277 + $0x10] sm:$0xff] %vm152, %v267
        %281 = vst.msk [vmem:[%s277 + $0x120] sm:$0xff] %vm152, %v268
        %282 = vst.msk [vmem:[%s277 + $0x128] sm:$0xff] %vm152, %v269
        %283 = vst.msk [vmem:[%s277 + $0x130] sm:$0xff] %vm152, %v270
        %284 = vst.msk [vmem:[%s277 + $0x240] sm:$0xff] %vm152, %v271
        %285 = vst.msk [vmem:[%s277 + $0x248] sm:$0xff] %vm152, %v272
        %286 = vst.msk [vmem:[%s277 + $0x250] sm:$0xff] %vm152, %v273
        %287 = vst.msk [vmem:[%s277 + $0x360] sm:$0xff] %vm152, %v274
        %288 = vst.msk [vmem:[%s277 + $0x368] sm:$0xff] %vm152, %v275
        %289 = vst.msk [vmem:[%s277 + $0x370] sm:$0xff] %vm152, %v276
        %v290 = vld [vmem:[%s118 + $0x30] sm:$0xff]
        %v291 = vld [vmem:[%s118 + $0x90] sm:$0xff]
        %v292 = vld [vmem:[%s118 + $0xf0] sm:$0xff]
        %v293 = vld [vmem:[%s118 + $0x150] sm:$0xff]
        %v294 = vld [vmem:[%s118 + $0x1b0] sm:$0xff]
        %v295 = vld [vmem:[%s118 + $0x210] sm:$0xff]
        %v296 = vld [vmem:[%s118 + $0x270] sm:$0xff]
        %v297 = vld [vmem:[%s118 + $0x2d0] sm:$0xff]
        %v298 = vld [vmem:[%s118 + $0x330] sm:$0xff]
        %v299 = vld [vmem:[%s118 + $0x390] sm:$0xff]
        %v300 = vld [vmem:[%s118 + $0x3f0] sm:$0xff]
        %v301 = vld [vmem:[%s118 + $0x450] sm:$0xff]
        %s302 = scalar_lea.vmem %s137, 144 [#allocation5]
        %303 = vst.msk [vmem:[%s302] sm:$0xff] %vm152, %v290
        %304 = vst.msk [vmem:[%s302 + $0x8] sm:$0xff] %vm152, %v291
        %305 = vst.msk [vmem:[%s302 + $0x10] sm:$0xff] %vm152, %v292
        %306 = vst.msk [vmem:[%s302 + $0x120] sm:$0xff] %vm152, %v293
        %307 = vst.msk [vmem:[%s302 + $0x128] sm:$0xff] %vm152, %v294
        %308 = vst.msk [vmem:[%s302 + $0x130] sm:$0xff] %vm152, %v295
        %309 = vst.msk [vmem:[%s302 + $0x240] sm:$0xff] %vm152, %v296
        %310 = vst.msk [vmem:[%s302 + $0x248] sm:$0xff] %vm152, %v297
        %311 = vst.msk [vmem:[%s302 + $0x250] sm:$0xff] %vm152, %v298
        %312 = vst.msk [vmem:[%s302 + $0x360] sm:$0xff] %vm152, %v299
        %313 = vst.msk [vmem:[%s302 + $0x368] sm:$0xff] %vm152, %v300
        %314 = vst.msk [vmem:[%s302 + $0x370] sm:$0xff] %vm152, %v301
        %v315 = vld [vmem:[%s118 + $0x38] sm:$0xff]
        %v316 = vld [vmem:[%s118 + $0x98] sm:$0xff]
        %v317 = vld [vmem:[%s118 + $0xf8] sm:$0xff]
        %v318 = vld [vmem:[%s118 + $0x158] sm:$0xff]
        %v319 = vld [vmem:[%s118 + $0x1b8] sm:$0xff]
        %v320 = vld [vmem:[%s118 + $0x218] sm:$0xff]
        %v321 = vld [vmem:[%s118 + $0x278] sm:$0xff]
        %v322 = vld [vmem:[%s118 + $0x2d8] sm:$0xff]
        %v323 = vld [vmem:[%s118 + $0x338] sm:$0xff]
        %v324 = vld [vmem:[%s118 + $0x398] sm:$0xff]
        %v325 = vld [vmem:[%s118 + $0x3f8] sm:$0xff]
        %v326 = vld [vmem:[%s118 + $0x458] sm:$0xff]
        %s327 = scalar_lea.vmem %s137, 168 [#allocation5]
        %328 = vst.msk [vmem:[%s327] sm:$0xff] %vm152, %v315
        %329 = vst.msk [vmem:[%s327 + $0x8] sm:$0xff] %vm152, %v316
        %330 = vst.msk [vmem:[%s327 + $0x10] sm:$0xff] %vm152, %v317
        %331 = vst.msk [vmem:[%s327 + $0x120] sm:$0xff] %vm152, %v318
        %332 = vst.msk [vmem:[%s327 + $0x128] sm:$0xff] %vm152, %v319
        %333 = vst.msk [vmem:[%s327 + $0x130] sm:$0xff] %vm152, %v320
        %334 = vst.msk [vmem:[%s327 + $0x240] sm:$0xff] %vm152, %v321
        %335 = vst.msk [vmem:[%s327 + $0x248] sm:$0xff] %vm152, %v322
        %336 = vst.msk [vmem:[%s327 + $0x250] sm:$0xff] %vm152, %v323
        %337 = vst.msk [vmem:[%s327 + $0x360] sm:$0xff] %vm152, %v324
        %338 = vst.msk [vmem:[%s327 + $0x368] sm:$0xff] %vm152, %v325
        %339 = vst.msk [vmem:[%s327 + $0x370] sm:$0xff] %vm152, %v326
        %v340 = vld [vmem:[%s118 + $0x40] sm:$0xff]
        %v341 = vld [vmem:[%s118 + $0xa0] sm:$0xff]
        %v342 = vld [vmem:[%s118 + $0x100] sm:$0xff]
        %v343 = vld [vmem:[%s118 + $0x160] sm:$0xff]
        %v344 = vld [vmem:[%s118 + $0x1c0] sm:$0xff]
        %v345 = vld [vmem:[%s118 + $0x220] sm:$0xff]
        %v346 = vld [vmem:[%s118 + $0x280] sm:$0xff]
        %v347 = vld [vmem:[%s118 + $0x2e0] sm:$0xff]
        %v348 = vld [vmem:[%s118 + $0x340] sm:$0xff]
        %v349 = vld [vmem:[%s118 + $0x3a0] sm:$0xff]
        %v350 = vld [vmem:[%s118 + $0x400] sm:$0xff]
        %v351 = vld [vmem:[%s118 + $0x460] sm:$0xff]
        %s352 = scalar_lea.vmem %s137, 192 [#allocation5]
        %353 = vst.msk [vmem:[%s352] sm:$0xff] %vm152, %v340
        %354 = vst.msk [vmem:[%s352 + $0x8] sm:$0xff] %vm152, %v341
        %355 = vst.msk [vmem:[%s352 + $0x10] sm:$0xff] %vm152, %v342
        %356 = vst.msk [vmem:[%s352 + $0x120] sm:$0xff] %vm152, %v343
        %357 = vst.msk [vmem:[%s352 + $0x128] sm:$0xff] %vm152, %v344
        %358 = vst.msk [vmem:[%s352 + $0x130] sm:$0xff] %vm152, %v345
        %359 = vst.msk [vmem:[%s352 + $0x240] sm:$0xff] %vm152, %v346
        %360 = vst.msk [vmem:[%s352 + $0x248] sm:$0xff] %vm152, %v347
        %361 = vst.msk [vmem:[%s352 + $0x250] sm:$0xff] %vm152, %v348
        %362 = vst.msk [vmem:[%s352 + $0x360] sm:$0xff] %vm152, %v349
        %363 = vst.msk [vmem:[%s352 + $0x368] sm:$0xff] %vm152, %v350
        %364 = vst.msk [vmem:[%s352 + $0x370] sm:$0xff] %vm152, %v351
        %v365 = vld [vmem:[%s118 + $0x48] sm:$0xff]
        %v366 = vld [vmem:[%s118 + $0xa8] sm:$0xff]
        %v367 = vld [vmem:[%s118 + $0x108] sm:$0xff]
        %v368 = vld [vmem:[%s118 + $0x168] sm:$0xff]
        %v369 = vld [vmem:[%s118 + $0x1c8] sm:$0xff]
        %v370 = vld [vmem:[%s118 + $0x228] sm:$0xff]
        %v371 = vld [vmem:[%s118 + $0x288] sm:$0xff]
        %v372 = vld [vmem:[%s118 + $0x2e8] sm:$0xff]
        %v373 = vld [vmem:[%s118 + $0x348] sm:$0xff]
        %v374 = vld [vmem:[%s118 + $0x3a8] sm:$0xff]
        %v375 = vld [vmem:[%s118 + $0x408] sm:$0xff]
        %v376 = vld [vmem:[%s118 + $0x468] sm:$0xff]
        %s377 = scalar_lea.vmem %s137, 216 [#allocation5]
        %378 = vst.msk [vmem:[%s377] sm:$0xff] %vm152, %v365
        %379 = vst.msk [vmem:[%s377 + $0x8] sm:$0xff] %vm152, %v366
        %380 = vst.msk [vmem:[%s377 + $0x10] sm:$0xff] %vm152, %v367
        %381 = vst.msk [vmem:[%s377 + $0x120] sm:$0xff] %vm152, %v368
        %382 = vst.msk [vmem:[%s377 + $0x128] sm:$0xff] %vm152, %v369
        %383 = vst.msk [vmem:[%s377 + $0x130] sm:$0xff] %vm152, %v370
        %384 = vst.msk [vmem:[%s377 + $0x240] sm:$0xff] %vm152, %v371
        %385 = vst.msk [vmem:[%s377 + $0x248] sm:$0xff] %vm152, %v372
        %386 = vst.msk [vmem:[%s377 + $0x250] sm:$0xff] %vm152, %v373
        %387 = vst.msk [vmem:[%s377 + $0x360] sm:$0xff] %vm152, %v374
        %388 = vst.msk [vmem:[%s377 + $0x368] sm:$0xff] %vm152, %v375
        %389 = vst.msk [vmem:[%s377 + $0x370] sm:$0xff] %vm152, %v376
        %v390 = vld [vmem:[%s118 + $0x50] sm:$0xff]
        %v391 = vld [vmem:[%s118 + $0xb0] sm:$0xff]
        %v392 = vld [vmem:[%s118 + $0x110] sm:$0xff]
        %v393 = vld [vmem:[%s118 + $0x170] sm:$0xff]
        %v394 = vld [vmem:[%s118 + $0x1d0] sm:$0xff]
        %v395 = vld [vmem:[%s118 + $0x230] sm:$0xff]
        %v396 = vld [vmem:[%s118 + $0x290] sm:$0xff]
        %v397 = vld [vmem:[%s118 + $0x2f0] sm:$0xff]
        %v398 = vld [vmem:[%s118 + $0x350] sm:$0xff]
        %v399 = vld [vmem:[%s118 + $0x3b0] sm:$0xff]
        %v400 = vld [vmem:[%s118 + $0x410] sm:$0xff]
        %v401 = vld [vmem:[%s118 + $0x470] sm:$0xff]
        %s402 = scalar_lea.vmem %s137, 240 [#allocation5]
        %403 = vst.msk [vmem:[%s402] sm:$0xff] %vm152, %v390
        %404 = vst.msk [vmem:[%s402 + $0x8] sm:$0xff] %vm152, %v391
        %405 = vst.msk [vmem:[%s402 + $0x10] sm:$0xff] %vm152, %v392
        %406 = vst.msk [vmem:[%s402 + $0x120] sm:$0xff] %vm152, %v393
        %407 = vst.msk [vmem:[%s402 + $0x128] sm:$0xff] %vm152, %v394
        %408 = vst.msk [vmem:[%s402 + $0x130] sm:$0xff] %vm152, %v395
        %409 = vst.msk [vmem:[%s402 + $0x240] sm:$0xff] %vm152, %v396
        %410 = vst.msk [vmem:[%s402 + $0x248] sm:$0xff] %vm152, %v397
        %411 = vst.msk [vmem:[%s402 + $0x250] sm:$0xff] %vm152, %v398
        %412 = vst.msk [vmem:[%s402 + $0x360] sm:$0xff] %vm152, %v399
        %413 = vst.msk [vmem:[%s402 + $0x368] sm:$0xff] %vm152, %v400
        %414 = vst.msk [vmem:[%s402 + $0x370] sm:$0xff] %vm152, %v401
        %v415 = vld [vmem:[%s118 + $0x58] sm:$0xff]
        %v416 = vld [vmem:[%s118 + $0xb8] sm:$0xff]
        %v417 = vld [vmem:[%s118 + $0x118] sm:$0xff]
        %v418 = vld [vmem:[%s118 + $0x178] sm:$0xff]
        %v419 = vld [vmem:[%s118 + $0x1d8] sm:$0xff]
        %v420 = vld [vmem:[%s118 + $0x238] sm:$0xff]
        %v421 = vld [vmem:[%s118 + $0x298] sm:$0xff]
        %v422 = vld [vmem:[%s118 + $0x2f8] sm:$0xff]
        %v423 = vld [vmem:[%s118 + $0x358] sm:$0xff]
        %v424 = vld [vmem:[%s118 + $0x3b8] sm:$0xff]
        %v425 = vld [vmem:[%s118 + $0x418] sm:$0xff]
        %v426 = vld [vmem:[%s118 + $0x478] sm:$0xff]
        %s427 = scalar_lea.vmem %s137, 264 [#allocation5]
        %428 = vst.msk [vmem:[%s427] sm:$0xff] %vm152, %v415
        %429 = vst.msk [vmem:[%s427 + $0x8] sm:$0xff] %vm152, %v416
        %430 = vst.msk [vmem:[%s427 + $0x10] sm:$0xff] %vm152, %v417
        %431 = vst.msk [vmem:[%s427 + $0x120] sm:$0xff] %vm152, %v418
        %432 = vst.msk [vmem:[%s427 + $0x128] sm:$0xff] %vm152, %v419
        %433 = vst.msk [vmem:[%s427 + $0x130] sm:$0xff] %vm152, %v420
        %434 = vst.msk [vmem:[%s427 + $0x240] sm:$0xff] %vm152, %v421
        %435 = vst.msk [vmem:[%s427 + $0x248] sm:$0xff] %vm152, %v422
        %436 = vst.msk [vmem:[%s427 + $0x250] sm:$0xff] %vm152, %v423
        %437 = vst.msk [vmem:[%s427 + $0x360] sm:$0xff] %vm152, %v424
        %438 = vst.msk [vmem:[%s427 + $0x368] sm:$0xff] %vm152, %v425
        %439 = vst.msk [vmem:[%s427 + $0x370] sm:$0xff] %vm152, %v426
        %s440 = sand.u32 %s52, 1
        %s441 = scalar_lea.sflag [#allocation4], %s440
        %s442 = sand.u32 %s52, 1
        %s443 = smul.addr %s442, 1152
        %s444 = scalar_lea.vmem [#allocation5], %s443
        // Predicated region
        $region29: #{tpu_custom_call.1} parent=23 // pred_check
          %p445 = pneg %p62
        $region30: #{tpu_custom_call.1} parent=23 // pred_check_branch
          %447 = sbr.rel (%p445) target = $region32
        $region31: #{tpu_custom_call.1} parent=23 // pred_region
          %s448 = smul.u32 4, %s18
          %450 = vsyncadd %s441, 0
          %s451 = smul.addr %s448, 36
          %s452 = smul.addr %s451, 8
          %s453 = scalar_lea.hbm %s1, %s452
          %s454 = sshll.u32 %s444, 4
          %s455 = int_to_ptr.vmem [resolvable:$true] %s454
          %s456 = sshll.u32 %s453, 4
          %s457 = int_to_ptr.hbm [resolvable:$true] %s456
          %462 = dma.vmem_to_hbm [thread:$0]  %s455, 18432, %s457, %s441, 128, 128, 8
        $region32: #{tpu_custom_call.1} parent=23 // pred_fallthru
          _
      $region24: #{tpu_custom_call.1} parent=5 // pred_fallthru
        _
      %p463 = scmp.le.s32.totalorder 2, %s13
      // Predicated region
      $region33: #{tpu_custom_call.1} parent=5 // pred_check
        %p464 = pneg %p463
      $region34: #{tpu_custom_call.1} parent=5 // pred_check_branch
        %466 = sbr.rel (%p464) target = $region36
      $region35: #{tpu_custom_call.1} parent=5 // pred_region
        %s467 = ssub.s32 %s13, 2
        // Predicated region
        $region37: #{tpu_custom_call.1} parent=35 // pred_check
          %p468 = pneg %p68
        $region38: #{tpu_custom_call.1} parent=35 // pred_check_branch
          %470 = sbr.rel (%p468) target = $region40
        $region39: #{tpu_custom_call.1} parent=35 // pred_region
          %s471 = sand.u32 %s53, 1
          %s472 = scalar_lea.sflag [#allocation4], %s471
          %s473 = sand.u32 %s53, 1
          %s474 = smul.addr %s473, 1152
          %s475 = scalar_lea.vmem [#allocation5], %s474
          %477 = dma.done %s472, 18432
        $region40: #{tpu_custom_call.1} parent=35 // pred_fallthru
          _
      $region36: #{tpu_custom_call.1} parent=5 // pred_fallthru
        _
    $region6: #{tpu_custom_call.1} parent=1 // loop_footer
      %s17 = sadd.s32 1, %s13
    $region7: #{tpu_custom_call.1} parent=1 // loop_footer_branch
      %12 = sbr.rel target = $region3
    $region8: #{tpu_custom_call.1} parent=1 // loop_exit
      _
    %478 = vsyncpa [#allocation3], 1
    %s479 = scalar_lea.sflag [#allocation3], 1
    %480 = vsyncpa %s479, 1
    %481 = vsyncpa [#allocation4], 1
    %s482 = scalar_lea.sflag [#allocation4], 1
    %483 = vsyncpa %s482, 1

</llo_original>
